<compile_context>
chip_gen: v7x
topology: tpu7x:2x2x1
jax: 0.10.0
libtpu: 0.0.40
codegen_flags: <defaults>
</compile_context>

<pallas_src>
import jax
import jax.numpy as jnp
from jax import lax
from jax.experimental import pallas as pl
from jax.experimental.pallas import tpu as pltpu


def _gate_kernel_single(x_ref, w_ref, b_ref, o_ref):
    # x: (M, K), w: (N, K) PyTorch layout, b: (1, N)
    z = lax.dot_general(
        x_ref[...], w_ref[...],
        dimension_numbers=(((1,), (1,)), ((), ())),   # x @ W.T, no transpose op
        preferred_element_type=jnp.float32,
    )
    o_ref[...] = jax.nn.sigmoid(z + b_ref[...]).astype(o_ref.dtype)


def _gate_kernel_tiled(x_ref, w_ref, b_ref, o_ref, acc_ref):
    k = pl.program_id(2)

    @pl.when(k == 0)
    def _():
        acc_ref[...] = jnp.zeros_like(acc_ref)

    acc_ref[...] += lax.dot_general(
        x_ref[...], w_ref[...],
        dimension_numbers=(((1,), (1,)), ((), ())),   # x_tile @ W_tile.T
        preferred_element_type=jnp.float32,
    )

    @pl.when(k == pl.num_programs(2) - 1)
    def _():
        o_ref[...] = jax.nn.sigmoid(acc_ref[...] + b_ref[...]).astype(o_ref.dtype)


def _pick_tile(dim, pref):
    """Largest multiple-of-128 tile <= pref that divides dim, else None."""
    t = min(pref, dim)
    t = (t // 128) * 128
    while t >= 128:
        if dim % t == 0:
            return t
        t -= 128
    return None


def latent_gate(latent, weight, bias, *, tm=256, tn=256, tk=256):
    """sigmoid(latent @ weight.T + bias); weight in PyTorch (D_out, D_in) layout.

    `latent` may have any number of leading dims; they are flattened into one
    token axis (metadata-only reshape) so all gate applications share one call.
    """
    D_out, D_in = weight.shape
    orig_shape = latent.shape
    x = latent.reshape(-1, D_in)
    M = x.shape[0]
    b2 = bias.reshape(1, D_out)

    tn_sel = _pick_tile(D_out, tn)
    tk_sel = _pick_tile(D_in, tk)

    itemsize = jnp.dtype(latent.dtype).itemsize
    single_bytes = (M * D_in + D_out * D_in + M * D_out + D_out) * itemsize

    use_tiled = (
        tn_sel is not None
        and tk_sel is not None
        and (M >= tm or single_bytes > (8 << 20))
    )

    if use_tiled:
        # Token-axis tile: TM if we have at least a full tile, otherwise the
        # smallest sublane-aligned (multiple of 8) tile covering all rows.
        tm_eff = tm if M >= tm else max(8, ((M + 7) // 8) * 8)
        m_pad = pl.cdiv(M, tm_eff) * tm_eff
        x_in = x if m_pad == M else jnp.pad(x, ((0, m_pad - M), (0, 0)))

        out = pl.pallas_call(
            _gate_kernel_tiled,
            out_shape=jax.ShapeDtypeStruct((m_pad, D_out), latent.dtype),
            grid_spec=pltpu.PrefetchScalarGridSpec(
                num_scalar_prefetch=0,
                grid=(m_pad // tm_eff, D_out // tn_sel, D_in // tk_sel),  # K last
                in_specs=[
                    pl.BlockSpec((tm_eff, tk_sel), lambda i, j, k: (i, k)),  # x tile
                    pl.BlockSpec((tn_sel, tk_sel), lambda i, j, k: (j, k)),  # W tile
                    pl.BlockSpec((1, tn_sel), lambda i, j, k: (0, j)),       # bias tile
                ],
                out_specs=pl.BlockSpec((tm_eff, tn_sel), lambda i, j, k: (i, j)),
                scratch_shapes=[pltpu.VMEM((tm_eff, tn_sel), jnp.float32)],
            ),
            compiler_params=pltpu.CompilerParams(
                dimension_semantics=("parallel", "parallel", "arbitrary"),
                # Safe everywhere (v5e default scoped VMEM is 16 MiB);
                # double-buffered tiles at these sizes use only a few MiB.
                vmem_limit_bytes=32 * 1024 * 1024,
            ),
        )(x_in, weight, b2)
        if m_pad != M:
            out = out[:M]
    else:
        # Tiny-problem path: whole problem resident in VMEM, single invocation.
        # At these sizes the call is launch/DMA-overhead bound; the real win is
        # batching at the call site (handled by the leading-dim flatten above)
        # or fusing the gate into the producer/consumer kernel.
        out = pl.pallas_call(
            _gate_kernel_single,
            out_shape=jax.ShapeDtypeStruct((M, D_out), latent.dtype),
            in_specs=[
                pl.BlockSpec(memory_space=pltpu.MemorySpace.VMEM),
                pl.BlockSpec(memory_space=pltpu.MemorySpace.VMEM),
                pl.BlockSpec(memory_space=pltpu.MemorySpace.VMEM),
            ],
            out_specs=pl.BlockSpec(memory_space=pltpu.MemorySpace.VMEM),
        )(x, weight, b2)

    return out.reshape(orig_shape[:-1] + (D_out,))


if __name__ == "__main__":
    key = jax.random.PRNGKey(0)
    k_x, k_w, k_b, k_x2, k_w2, k_b2, k_x3 = jax.random.split(key, 7)

    # ---- small case matching the module (single-block path) ----
    batch, seq, latent_dim = 2, 8, 32
    # Match the module init: normal(std=0.01) weight, default Linear bias init.
    weight = 0.01 * jax.random.normal(k_w, (latent_dim, latent_dim), jnp.float32)
    bound = 1.0 / jnp.sqrt(jnp.float32(latent_dim))
    bias = jax.random.uniform(k_b, (latent_dim,), jnp.float32,
                              minval=-bound, maxval=bound)
    latent = jax.random.normal(k_x, (batch, seq, latent_dim), jnp.float32)

    out = latent_gate(latent, weight, bias)
    jax.block_until_ready(out)

    ref = jax.nn.sigmoid(jnp.einsum("bsd,nd->bsn", latent, weight) + bias)
    assert out.shape == (batch, seq, latent_dim)
    assert jnp.allclose(out, ref, atol=1e-4, rtol=1e-4)

    # ---- larger case exercising the tiled, lane-dense, megacore path ----
    M2, D2 = 512, 256
    w2 = 0.01 * jax.random.normal(k_w2, (D2, D2), jnp.float32)
    bnd2 = 1.0 / jnp.sqrt(jnp.float32(D2))
    bias2 = jax.random.uniform(k_b2, (D2,), jnp.float32, minval=-bnd2, maxval=bnd2)
    x2 = jax.random.normal(k_x2, (M2, D2), jnp.float32)

    out2 = latent_gate(x2, w2, bias2, tm=256, tn=128, tk=128)   # grid (2, 2, 2)
    jax.block_until_ready(out2)
    ref2 = jax.nn.sigmoid(x2 @ w2.T + bias2)
    assert out2.shape == (M2, D2)
    # Loose tolerance: MXU default-precision accumulation order differs from XLA's.
    assert jnp.allclose(out2, ref2, atol=2e-3, rtol=2e-3)

    # ---- ragged token count exercising the padded tiled path ----
    M3 = 500                                   # not a multiple of 256 -> padded to 512
    x3 = jax.random.normal(k_x3, (M3, D2), jnp.float32)
    out3 = latent_gate(x3, w2, bias2)          # default tiles, grid (2, 1, 1)
    jax.block_until_ready(out3)
    ref3 = jax.nn.sigmoid(x3 @ w2.T + bias2)
    assert out3.shape == (M3, D2)
    assert jnp.allclose(out3, ref3, atol=2e-3, rtol=2e-3)

    print("KERNEL_OK")
</pallas_src>

<mosaic_0001>
module attributes {stable_mosaic.version = 11 : i64} {
  func.func @_gate_kernel_single(%arg0: memref<16x32xf32, #tpu.memory_space<vmem>>, %arg1: memref<32x32xf32, #tpu.memory_space<vmem>>, %arg2: memref<1x32xf32, #tpu.memory_space<vmem>>, %arg3: memref<16x32xf32, #tpu.memory_space<vmem>>) attributes {dimension_semantics = [], scalar_prefetch = 0 : i64, scratch_operands = 0 : i64, tpu.core_type = #tpu.core_type<tc>} {
    %c0 = arith.constant 0 : index
    %c0_0 = arith.constant 0 : index
    %0 = vector.load %arg0[%c0, %c0_0] : memref<16x32xf32, #tpu.memory_space<vmem>>, vector<16x32xf32>
    %c0_1 = arith.constant 0 : index
    %c0_2 = arith.constant 0 : index
    %1 = vector.load %arg1[%c0_1, %c0_2] : memref<32x32xf32, #tpu.memory_space<vmem>>, vector<32x32xf32>
    %cst = arith.constant dense<0.000000e+00> : vector<16x32xf32>
    %2 = tpu.matmul %0, %1, %cst {dimension_numbers = #tpu.dot_dimension_numbers<[1], [1], [0], [0], [0, 0, 1, 0], [], []>} : vector<16x32xf32>, vector<32x32xf32>, vector<16x32xf32> -> vector<16x32xf32>
    %c0_3 = arith.constant 0 : index
    %c0_4 = arith.constant 0 : index
    %3 = vector.load %arg2[%c0_3, %c0_4] : memref<1x32xf32, #tpu.memory_space<vmem>>, vector<1x32xf32>
    %4 = vector.broadcast %3 : vector<1x32xf32> to vector<16x32xf32>
    %5 = arith.addf %2, %4 : vector<16x32xf32>
    %6 = arith.negf %5 : vector<16x32xf32>
    %7 = math.exp %6 : vector<16x32xf32>
    %cst_5 = arith.constant 1.000000e+00 : f32
    %8 = vector.broadcast %cst_5 : f32 to vector<16x32xf32>
    %9 = arith.addf %8, %7 : vector<16x32xf32>
    %10 = arith.divf %8, %9 : vector<16x32xf32>
    %c0_6 = arith.constant 0 : index
    %c0_7 = arith.constant 0 : index
    %11 = vector.load %arg3[%c0_6, %c0_7] : memref<16x32xf32, #tpu.memory_space<vmem>>, vector<16x32xf32>
    tpu.vector_store %arg3[%c0_6, %c0_7], %10 {strides = array<i32>} : memref<16x32xf32, #tpu.memory_space<vmem>>, vector<16x32xf32>,
    return
  }
}

</mosaic_0001>

<llo_original>
// kernel: tpu_custom_call.1
$region0: #{tpu_custom_call.1}
  #allocation0 [shape = 'u32[]', space=smem, size = 0x4, offset = 0x4, fixed_abs, tag = 'smem constant byte address 0x4 - core index']
  #allocation1 [shape = 'u32[144,128]{1,0:T(1,128)}', space=vmem, size = 0x12000, scoped, tag = 'internal scratch']
  %s0 = inlined_call_operand.hbm [shape: f32[16,32], index: 0, kind: input, shape index: {}]
  %s1 = inlined_call_operand.hbm [shape: f32[32,32], index: 1, kind: input, shape index: {}]
  %s2 = inlined_call_operand.vmem [shape: f32[1,32], index: 2, kind: input, shape index: {}]
  %s3 = inlined_call_operand.hbm [shape: f32[16,32], index: 3, kind: output, shape index: {}]
  %s4 = sld [smem:[#allocation0]]
  $region30: #{tpu_custom_call.1} parent=0
    _
  %s6 = ssub.s32 1, %s4
  %s7 = scalar_select 0, %s6, %s4
  $region1: #{tpu_custom_call.1} parent=0
    #allocation2 [shape = 'u8[8192]{0}', space=vmem, size = 0x2000, scoped, tag = 'input window, operand 0, single buffered']
    #allocation3 [shape = 's32[1]{0}', space=sflag, size = 0x4, scoped, tag = 'scoped memory for tpu_custom_call.1']
    #allocation4 [shape = 's32[1]{0}', space=sflag, size = 0x4, scoped, tag = 'scoped memory for tpu_custom_call.1']
    #allocation5 [shape = 'u8[16384]{0}', space=vmem, size = 0x4000, scoped, tag = 'input window, operand 1, single buffered']
    #allocation6 [shape = 's32[1]{0}', space=sflag, size = 0x4, scoped, tag = 'scoped memory for tpu_custom_call.1']
    #allocation7 [shape = 'u8[8192]{0}', space=vmem, size = 0x2000, scoped, tag = 'output window, operand 0, single buffered']
    %8 = vsyncpa [#allocation3], 0
    %9 = vsyncpa [#allocation6], 0
    %10 = vsyncpa [#allocation4], 0
    // Predicated region
    $region2: #{tpu_custom_call.1} parent=1 // pred_check
      _
    $region3: #{tpu_custom_call.1} parent=1 // pred_check_branch
      %12 = sbr.rel (0) target = $region5
    $region4: #{tpu_custom_call.1} parent=1 // pred_region
      %s14 = ssub.s32 256, 256
      %15 = vsyncadd [#allocation3], %s14
      %s16 = sshll.u32 [#allocation2], 4
      %s17 = int_to_ptr.vmem [resolvable:$true] %s16
      %22 = dma.hbm_to_vmem [thread:$0]  %s0, 256, %s17, [#allocation3], 128, 128, 8
    $region5: #{tpu_custom_call.1} parent=1 // pred_fallthru
      _
    // Predicated region
    $region6: #{tpu_custom_call.1} parent=1 // pred_check
      _
    $region7: #{tpu_custom_call.1} parent=1 // pred_check_branch
      %24 = sbr.rel (0) target = $region9
    $region8: #{tpu_custom_call.1} parent=1 // pred_region
      %s26 = ssub.s32 512, 512
      %27 = vsyncadd [#allocation6], %s26
      %s28 = sshll.u32 [#allocation5], 4
      %s29 = int_to_ptr.vmem [resolvable:$true] %s28
      %34 = dma.hbm_to_vmem [thread:$0]  %s1, 512, %s29, [#allocation6], 128, 128, 8
    $region9: #{tpu_custom_call.1} parent=1 // pred_fallthru
      _
    // Predicated region
    $region10: #{tpu_custom_call.1} parent=1 // pred_check
      _
    $region11: #{tpu_custom_call.1} parent=1 // pred_check_branch
      %36 = sbr.rel (0) target = $region13
    $region12: #{tpu_custom_call.1} parent=1 // pred_region
      _
    $region13: #{tpu_custom_call.1} parent=1 // pred_fallthru
      _
    // Predicated region
    $region14: #{tpu_custom_call.1} parent=1 // pred_check
      _
    $region15: #{tpu_custom_call.1} parent=1 // pred_check_branch
      %38 = sbr.rel (0) target = $region17
    $region16: #{tpu_custom_call.1} parent=1 // pred_region
      %39 = dma.done [#allocation3], 256
    $region17: #{tpu_custom_call.1} parent=1 // pred_fallthru
      _
    // Predicated region
    $region18: #{tpu_custom_call.1} parent=1 // pred_check
      _
    $region19: #{tpu_custom_call.1} parent=1 // pred_check_branch
      %41 = sbr.rel (0) target = $region21
    $region20: #{tpu_custom_call.1} parent=1 // pred_region
      %42 = dma.done [#allocation6], 512
    $region21: #{tpu_custom_call.1} parent=1 // pred_fallthru
      _
    %v43 = vld [vmem:[#allocation2] sm:$0xff]
    %v44 = vld [vmem:[#allocation2 + $0x8] sm:$0xff]
    %v45 = vld [vmem:[#allocation5] sm:$0xff]
    %v46 = vld [vmem:[#allocation5 + $0x8] sm:$0xff]
    %v47 = vld [vmem:[#allocation5 + $0x10] sm:$0xff]
    %v48 = vld [vmem:[#allocation5 + $0x18] sm:$0xff]
    %v49 = vld [vmem:[%s2] sm:$0x1]
    %v51 = vlaneseq
    %v52 = vshrl.u32 %v51, 7
    %v53 = vsub.s32 0, %v52
    %v54 = vrot.slane %v49, %v53
    %vm56 = vcmask 261120
    %v58 = vsel %vm56, %v43, 0
    %v61 = vsel %vm56, %v44, 0
    %v64 = vsel %vm56, %v45, 0
    %v67 = vsel %vm56, %v46, 0
    %v70 = vsel %vm56, %v47, 0
    %v73 = vsel %vm56, %v48, 0
    %75 = vmatprep.subr.mxu0 0.0
    %76 = vmatpush1.xpose.msra.mxu0 %v64
    %77 = vmatprep.subr.mxu0 0.0
    %78 = vmatpush1.xpose.msra.mxu0 %v67
    %79 = vmatprep.subr.mxu0 0.0
    %80 = vmatpush1.xpose.msra.mxu0 %v70
    %81 = vmatprep.subr.mxu0 0.0
    %82 = vmatpush1.xpose.msra.mxu0 %v73
    %83 = vmatprep.subr.mxu0 0.0
    %84 = vmatpush1.xpose.msra.mxu0 0.0
    %85 = vmatprep.subr.mxu0 0.0
    %86 = vmatpush1.xpose.msra.mxu0 0.0
    %87 = vmatprep.subr.mxu0 0.0
    %88 = vmatpush1.xpose.msra.mxu0 0.0
    %89 = vmatprep.subr.mxu0 0.0
    %90 = vmatpush1.xpose.msra.mxu0 0.0
    %91 = vmatprep.subr.mxu0 0.0
    %92 = vmatpush1.xpose.msra.mxu0 0.0
    %93 = vmatprep.subr.mxu0 0.0
    %94 = vmatpush1.xpose.msra.mxu0 0.0
    %95 = vmatprep.subr.mxu0 0.0
    %96 = vmatpush1.xpose.msra.mxu0 0.0
    %97 = vmatprep.subr.mxu0 0.0
    %98 = vmatpush1.xpose.msra.mxu0 0.0
    %99 = vmatprep.subr.mxu0 0.0
    %100 = vmatpush1.xpose.msra.mxu0 0.0
    %101 = vmatprep.subr.mxu0 0.0
    %102 = vmatpush1.xpose.msra.mxu0 0.0
    %103 = vmatprep.subr.mxu0 0.0
    %104 = vmatpush1.xpose.msra.mxu0 0.0
    %105 = vmatprep.subr.mxu0 0.0
    %106 = vmatpush1.xpose.msra.mxu0 0.0
    %107 = vmatprep.subr.mxu0 0.0
    %108 = vmatpush1.xpose.msra.mxu0 0.0
    %109 = vmatprep.subr.mxu0 0.0
    %110 = vmatpush1.xpose.msra.mxu0 0.0
    %111 = vmatprep.subr.mxu0 0.0
    %112 = vmatpush1.xpose.msra.mxu0 0.0
    %113 = vmatprep.subr.mxu0 0.0
    %114 = vmatpush1.xpose.msra.mxu0 0.0
    %115 = vmatprep.subr.mxu0 0.0
    %116 = vmatpush1.xpose.msra.mxu0 0.0
    %117 = vmatprep.subr.mxu0 0.0
    %118 = vmatpush1.xpose.msra.mxu0 0.0
    %119 = vmatprep.subr.mxu0 0.0
    %120 = vmatpush1.xpose.msra.mxu0 0.0
    %121 = vmatprep.subr.mxu0 0.0
    %122 = vmatpush1.xpose.msra.mxu0 0.0
    %123 = vmatprep.subr.mxu0 0.0
    %124 = vmatpush1.xpose.msra.mxu0 0.0
    %125 = vmatprep.subr.mxu0 0.0
    %126 = vmatpush1.xpose.msra.mxu0 0.0
    %127 = vmatprep.subr.mxu0 0.0
    %128 = vmatpush1.xpose.msra.mxu0 0.0
    %129 = vmatprep.subr.mxu0 0.0
    %130 = vmatpush1.xpose.msra.mxu0 0.0
    %131 = vmatprep.subr.mxu0 0.0
    %132 = vmatpush1.xpose.msra.mxu0 0.0
    %133 = vmatprep.subr.mxu0 0.0
    %134 = vmatpush1.xpose.msra.mxu0 0.0
    %135 = vmatprep.subr.mxu0 0.0
    %136 = vmatpush1.xpose.msra.mxu0 0.0
    %137 = vmatprep.subr.mxu0 0.0
    %138 = vmatpush1.xpose.msra.mxu0 0.0
    %139 = vmatprep.mubr.f32.mxu0 0.0
    %140 = vmatmul.mubr.f32.gmra.mrb[0].mxu0 %v58
    %v141 = vpop.f32.mrb[0].mxu0
    %v142 = vadd.f32 %v54, %v141
    %v143 = vpop.f32.mrb[0].mxu0
    %144 = vmatprep.mubr.f32.mxu0 0.0
    %145 = vmatmul.mubr.f32.gmra.mrb[0].mxu0 %v61
    %v146 = vpop.f32.mrb[0].mxu0
    %v147 = vadd.f32 %v54, %v146
    %v148 = vpop.f32.mrb[0].mxu0
    %149 = vdwg.mxu0
    %v150 = vxor.u32 %v142, 2147483648
    %v151 = vxor.u32 %v147, 2147483648
    %v152 = vmul.f32 %v150, 1.442695
    %v153 = vpow.pop %v152
    %v154 = vmul.f32 %v151, 1.442695
    %v155 = vpow.pop %v154
    %v156 = vadd.f32 %v153, 1.0
    %v157 = vadd.f32 %v155, 1.0
    %v158 = vrcp.pop %v156
    %v159 = vmul.f32 1.0, %v158
    %v160 = vrcp.pop %v157
    %v161 = vmul.f32 1.0, %v160
    %162 = vst.msk [vmem:[#allocation7] sm:$0xff] %vm56, %v159
    %163 = vst.msk [vmem:[#allocation7 + $0x8] sm:$0xff] %vm56, %v161
    // Predicated region
    $region22: #{tpu_custom_call.1} parent=1 // pred_check
      _
    $region23: #{tpu_custom_call.1} parent=1 // pred_check_branch
      %165 = sbr.rel (0) target = $region25
    $region24: #{tpu_custom_call.1} parent=1 // pred_region
      %s167 = ssub.s32 256, 256
      %168 = vsyncadd [#allocation4], %s167
      %s169 = sshll.u32 [#allocation7], 4
      %s170 = int_to_ptr.vmem [resolvable:$true] %s169
      %175 = dma.vmem_to_hbm [thread:$0]  %s170, 256, %s3, [#allocation4], 128, 128, 8
    $region25: #{tpu_custom_call.1} parent=1 // pred_fallthru
      _
    // Predicated region
    $region26: #{tpu_custom_call.1} parent=1 // pred_check
      _
    $region27: #{tpu_custom_call.1} parent=1 // pred_check_branch
      %177 = sbr.rel (0) target = $region29
    $region28: #{tpu_custom_call.1} parent=1 // pred_region
      %178 = dma.done [#allocation4], 256
    $region29: #{tpu_custom_call.1} parent=1 // pred_fallthru
      _
    %179 = vsyncpa [#allocation3], 1
    %180 = vsyncpa [#allocation6], 1
    %181 = vsyncpa [#allocation4], 1

</llo_original>
